<compile_context>
chip_gen: v7x
topology: tpu7x:2x2x1
jax: 0.10.0
libtpu: 0.0.40
codegen_flags: <defaults>
</compile_context>

<pallas_src>
import numpy as np
import jax
import jax.numpy as jnp
from jax import lax
from jax.experimental import pallas as pl
from jax.experimental.pallas import tpu as pltpu

GAMMA = 0.2
NUM_ITER = 5


def _softmax_rows(x):
    # softmax over axis=1 (matches nn.Softmax(dim=1) on a 2-D input)
    m = jnp.max(x, axis=1, keepdims=True)
    e = jnp.exp(x - m)
    return e * pl.reciprocal(jnp.sum(e, axis=1, keepdims=True), approx=False)


def crf_rnn_kernel(def_idxs_ref, a_ref, cm_ref, out_ref):
    # Per-sample (V, L) block; a_mat (V, V) and comp_matrix (L, L) are
    # VMEM-resident across the whole batch grid.
    U = jnp.log(jnp.clip(def_idxs_ref[...], 1e-6, 1.0))
    a_mat = a_ref[...]
    cm = cm_ref[...]

    def body(_, q):
        phi = U - jnp.dot(
            jnp.dot(a_mat, q, preferred_element_type=jnp.float32),
            cm, preferred_element_type=jnp.float32)
        return _softmax_rows(phi)

    out_ref[...] = lax.fori_loop(0, NUM_ITER, body, _softmax_rows(U),
                                 unroll=True)


def _build_a_mat(def_cont_ico_crf, filter_weights, spatial_weights):
    """q-independent prologue, computed once per call and shared by every
    sample and every mean-field iteration (negation folded in)."""
    coords = def_cont_ico_crf.astype(jnp.float32)                # (V, 3)
    V = coords.shape[0]
    diff = coords[:, None, :] - coords[None, :, :]
    alpha = jnp.sum(diff * diff, axis=-1)                        # ||xi - xj||^2
    smooth = jnp.exp(-alpha / (2.0 * GAMMA * GAMMA))
    smooth = smooth * (1.0 - jnp.eye(V, dtype=jnp.float32))      # fill_diagonal_(0)
    filter_mat = filter_weights.astype(jnp.float32) * smooth
    return -(spatial_weights.astype(jnp.float32) @ filter_mat)   # (V, V)


def crf_rnn_forward_batched(def_idxs, def_cont_ico_crf, filter_weights,
                            spatial_weights, comp_matrix):
    """def_idxs: (B, V, L); returns (B, V, L)."""
    B, V, L = def_idxs.shape
    a_mat = _build_a_mat(def_cont_ico_crf, filter_weights, spatial_weights)
    cm = comp_matrix.astype(jnp.float32)

    cost = pl.CostEstimate(
        flops=int(B * NUM_ITER * 2 * (V * V * L + V * L * L)),
        transcendentals=int(B * (NUM_ITER + 1) * V * L),
        bytes_accessed=int(4 * (2 * B * V * L + V * V + L * L)),
    )

    return pl.pallas_call(
        crf_rnn_kernel,
        out_shape=jax.ShapeDtypeStruct((B, V, L), jnp.float32),
        grid=(B,),
        in_specs=[
            # per-sample block, squeezed batch dim -> kernel sees (V, L)
            pl.BlockSpec((None, V, L), lambda b: (b, 0, 0)),
            # batch-invariant operands: constant block index -> stay resident
            pl.BlockSpec((V, V), lambda b: (0, 0)),
            pl.BlockSpec((L, L), lambda b: (0, 0)),
        ],
        out_specs=pl.BlockSpec((None, V, L), lambda b: (b, 0, 0)),
        compiler_params=pltpu.CompilerParams(
            dimension_semantics=("parallel",)),
        cost_estimate=cost,
    )(def_idxs.astype(jnp.float32), a_mat, cm)


def crf_rnn_forward(def_idxs, def_cont_ico_crf, filter_weights,
                    spatial_weights, comp_matrix):
    """Single-sample path matching the PyTorch module signature."""
    out = crf_rnn_forward_batched(def_idxs[None], def_cont_ico_crf,
                                  filter_weights, spatial_weights, comp_matrix)
    return out[0]


def crf_rnn_reference(def_idxs, coords, fw, sw, cm):
    """Pure-JAX reference mirroring the PyTorch forward (single sample)."""
    V = coords.shape[0]
    diff = coords[:, None, :] - coords[None, :, :]
    alpha = jnp.sum(diff * diff, axis=-1)
    smooth = jnp.exp(-alpha / (2.0 * GAMMA ** 2))
    smooth = smooth * (1.0 - jnp.eye(V, dtype=smooth.dtype))
    filter_mat = fw * smooth
    U = jnp.log(jnp.clip(def_idxs, 1e-6, 1.0))
    q = jax.nn.softmax(U, axis=1)
    for _ in range(NUM_ITER):
        phi = filter_mat @ q
        phi = -(sw @ phi)
        phi = phi @ cm
        phi = U - phi
        q = jax.nn.softmax(phi, axis=1)
    return q


if __name__ == "__main__":
    control_ver = 16   # number of control points (V)
    num_labels = 32    # labels per control point (L)
    batch = 2          # samples processed per kernel launch

    key = jax.random.PRNGKey(0)
    k1, k2 = jax.random.split(key)

    # Inputs
    def_idxs = jax.random.uniform(
        k1, (batch, control_ver, num_labels), dtype=jnp.float32,
        minval=0.0, maxval=1.0)
    def_cont_ico_crf = jax.random.normal(
        k2, (control_ver, 3), dtype=jnp.float32) * 0.3

    # Parameters, initialized exactly as in CrfRnn.__init__ (deterministic).
    filter_weights = jnp.ones((control_ver, control_ver), dtype=jnp.float32)
    spatial_weights = 4.0 * jnp.eye(control_ver, dtype=jnp.float32)
    comp_matrix = jnp.eye(num_labels, dtype=jnp.float32)

    # Batched kernel launch.
    out = crf_rnn_forward_batched(def_idxs, def_cont_ico_crf, filter_weights,
                                  spatial_weights, comp_matrix)
    out = jax.block_until_ready(out)
    assert out.shape == (batch, control_ver, num_labels)

    # Per-sample check against the pure-JAX reference.
    for b in range(batch):
        ref_b = crf_rnn_reference(def_idxs[b], def_cont_ico_crf,
                                  filter_weights, spatial_weights, comp_matrix)
        ref_b = jax.block_until_ready(ref_b)
        assert np.allclose(np.asarray(out[b]), np.asarray(ref_b),
                           atol=1e-5, rtol=1e-5), \
            f"Pallas kernel output does not match JAX reference (sample {b})"

    # Single-sample wrapper (module-equivalent signature) also works.
    out0 = crf_rnn_forward(def_idxs[0], def_cont_ico_crf, filter_weights,
                           spatial_weights, comp_matrix)
    out0 = jax.block_until_ready(out0)
    ref0 = crf_rnn_reference(def_idxs[0], def_cont_ico_crf, filter_weights,
                             spatial_weights, comp_matrix)
    assert np.allclose(np.asarray(out0), np.asarray(ref0),
                       atol=1e-5, rtol=1e-5)

    print("KERNEL_OK")
</pallas_src>

<mosaic_0001>
module attributes {stable_mosaic.version = 11 : i64} {
  func.func @crf_rnn_kernel(%arg0: i32, %arg1: memref<1x16x32xf32, #tpu.memory_space<vmem>>, %arg2: memref<16x16xf32, #tpu.memory_space<vmem>>, %arg3: memref<32x32xf32, #tpu.memory_space<vmem>>, %arg4: memref<1x16x32xf32, #tpu.memory_space<vmem>>) attributes {dimension_semantics = [#tpu.dimension_semantics<parallel>], iteration_bounds = array<i64: 2>, scalar_prefetch = 0 : i64, scratch_operands = 0 : i64, tpu.core_type = #tpu.core_type<tc>, window_params = [{transform_indices = @transform_0, window_bounds = array<i64: 1, 16, 32>}, {pipeline_mode = #tpu.pipeline_mode<synchronous>, transform_indices = @transform_1, window_bounds = array<i64: 16, 16>}, {pipeline_mode = #tpu.pipeline_mode<synchronous>, transform_indices = @transform_2, window_bounds = array<i64: 32, 32>}, {transform_indices = @transform_3, window_bounds = array<i64: 1, 16, 32>}]} {
    %c0 = arith.constant 0 : index
    %c0_0 = arith.constant 0 : index
    %c0_1 = arith.constant 0 : index
    %0 = vector.load %arg1[%c0, %c0_0, %c0_1] : memref<1x16x32xf32, #tpu.memory_space<vmem>>, vector<1x16x32xf32>
    %1 = vector.shape_cast %0 : vector<1x16x32xf32> to vector<16x32xf32>
    %cst = arith.constant 9.99999997E-7 : f32
    %cst_2 = arith.constant 1.000000e+00 : f32
    %2 = vector.broadcast %cst : f32 to vector<16x32xf32>
    %3 = arith.maximumf %2, %1 : vector<16x32xf32>
    %4 = vector.broadcast %cst_2 : f32 to vector<16x32xf32>
    %5 = arith.minimumf %4, %3 : vector<16x32xf32>
    %6 = math.log %5 : vector<16x32xf32>
    %c0_3 = arith.constant 0 : index
    %c0_4 = arith.constant 0 : index
    %7 = vector.load %arg2[%c0_3, %c0_4] : memref<16x16xf32, #tpu.memory_space<vmem>>, vector<16x16xf32>
    %c0_5 = arith.constant 0 : index
    %c0_6 = arith.constant 0 : index
    %8 = vector.load %arg3[%c0_5, %c0_6] : memref<32x32xf32, #tpu.memory_space<vmem>>, vector<32x32xf32>
    %cst_7 = arith.constant dense<0xFF800000> : vector<16xf32>
    %9 = vector.multi_reduction <maximumf>, %6, %cst_7 [1] : vector<16x32xf32> to vector<16xf32>
    %10 = vector.shape_cast %9 : vector<16xf32> to vector<16x1xf32>
    %11 = vector.broadcast %10 : vector<16x1xf32> to vector<16x32xf32>
    %12 = arith.subf %6, %11 : vector<16x32xf32>
    %13 = math.exp %12 : vector<16x32xf32>
    %cst_8 = arith.constant dense<0.000000e+00> : vector<16xf32>
    %14 = vector.multi_reduction <add>, %13, %cst_8 [1] : vector<16x32xf32> to vector<16xf32>
    %15 = vector.shape_cast %14 : vector<16xf32> to vector<16x1xf32>
    %16 = tpu.reciprocal %15 : vector<16x1xf32> -> vector<16x1xf32>
    %17 = vector.broadcast %16 : vector<16x1xf32> to vector<16x32xf32>
    %18 = arith.mulf %13, %17 : vector<16x32xf32>
    %c0_i32 = arith.constant 0 : i32
    %cst_9 = arith.constant dense<0.000000e+00> : vector<16x32xf32>
    %19 = tpu.matmul %7, %18, %cst_9 {dimension_numbers = #tpu.dot_dimension_numbers<[1], [0], [0], [1], [0, 0, 1, 1], [], []>} : vector<16x16xf32>, vector<16x32xf32>, vector<16x32xf32> -> vector<16x32xf32>
    %cst_10 = arith.constant dense<0.000000e+00> : vector<16x32xf32>
    %20 = tpu.matmul %19, %8, %cst_10 {dimension_numbers = #tpu.dot_dimension_numbers<[1], [0], [0], [1], [0, 0, 1, 1], [], []>} : vector<16x32xf32>, vector<32x32xf32>, vector<16x32xf32> -> vector<16x32xf32>
    %21 = arith.subf %6, %20 : vector<16x32xf32>
    %cst_11 = arith.constant dense<0xFF800000> : vector<16xf32>
    %22 = vector.multi_reduction <maximumf>, %21, %cst_11 [1] : vector<16x32xf32> to vector<16xf32>
    %23 = vector.shape_cast %22 : vector<16xf32> to vector<16x1xf32>
    %24 = vector.broadcast %23 : vector<16x1xf32> to vector<16x32xf32>
    %25 = arith.subf %21, %24 : vector<16x32xf32>
    %26 = math.exp %25 : vector<16x32xf32>
    %cst_12 = arith.constant dense<0.000000e+00> : vector<16xf32>
    %27 = vector.multi_reduction <add>, %26, %cst_12 [1] : vector<16x32xf32> to vector<16xf32>
    %28 = vector.shape_cast %27 : vector<16xf32> to vector<16x1xf32>
    %29 = tpu.reciprocal %28 : vector<16x1xf32> -> vector<16x1xf32>
    %30 = vector.broadcast %29 : vector<16x1xf32> to vector<16x32xf32>
    %31 = arith.mulf %26, %30 : vector<16x32xf32>
    %c1_i32 = arith.constant 1 : i32
    %cst_13 = arith.constant dense<0.000000e+00> : vector<16x32xf32>
    %32 = tpu.matmul %7, %31, %cst_13 {dimension_numbers = #tpu.dot_dimension_numbers<[1], [0], [0], [1], [0, 0, 1, 1], [], []>} : vector<16x16xf32>, vector<16x32xf32>, vector<16x32xf32> -> vector<16x32xf32>
    %cst_14 = arith.constant dense<0.000000e+00> : vector<16x32xf32>
    %33 = tpu.matmul %32, %8, %cst_14 {dimension_numbers = #tpu.dot_dimension_numbers<[1], [0], [0], [1], [0, 0, 1, 1], [], []>} : vector<16x32xf32>, vector<32x32xf32>, vector<16x32xf32> -> vector<16x32xf32>
    %34 = arith.subf %6, %33 : vector<16x32xf32>
    %cst_15 = arith.constant dense<0xFF800000> : vector<16xf32>
    %35 = vector.multi_reduction <maximumf>, %34, %cst_15 [1] : vector<16x32xf32> to vector<16xf32>
    %36 = vector.shape_cast %35 : vector<16xf32> to vector<16x1xf32>
    %37 = vector.broadcast %36 : vector<16x1xf32> to vector<16x32xf32>
    %38 = arith.subf %34, %37 : vector<16x32xf32>
    %39 = math.exp %38 : vector<16x32xf32>
    %cst_16 = arith.constant dense<0.000000e+00> : vector<16xf32>
    %40 = vector.multi_reduction <add>, %39, %cst_16 [1] : vector<16x32xf32> to vector<16xf32>
    %41 = vector.shape_cast %40 : vector<16xf32> to vector<16x1xf32>
    %42 = tpu.reciprocal %41 : vector<16x1xf32> -> vector<16x1xf32>
    %43 = vector.broadcast %42 : vector<16x1xf32> to vector<16x32xf32>
    %44 = arith.mulf %39, %43 : vector<16x32xf32>
    %c2_i32 = arith.constant 2 : i32
    %cst_17 = arith.constant dense<0.000000e+00> : vector<16x32xf32>
    %45 = tpu.matmul %7, %44, %cst_17 {dimension_numbers = #tpu.dot_dimension_numbers<[1], [0], [0], [1], [0, 0, 1, 1], [], []>} : vector<16x16xf32>, vector<16x32xf32>, vector<16x32xf32> -> vector<16x32xf32>
    %cst_18 = arith.constant dense<0.000000e+00> : vector<16x32xf32>
    %46 = tpu.matmul %45, %8, %cst_18 {dimension_numbers = #tpu.dot_dimension_numbers<[1], [0], [0], [1], [0, 0, 1, 1], [], []>} : vector<16x32xf32>, vector<32x32xf32>, vector<16x32xf32> -> vector<16x32xf32>
    %47 = arith.subf %6, %46 : vector<16x32xf32>
    %cst_19 = arith.constant dense<0xFF800000> : vector<16xf32>
    %48 = vector.multi_reduction <maximumf>, %47, %cst_19 [1] : vector<16x32xf32> to vector<16xf32>
    %49 = vector.shape_cast %48 : vector<16xf32> to vector<16x1xf32>
    %50 = vector.broadcast %49 : vector<16x1xf32> to vector<16x32xf32>
    %51 = arith.subf %47, %50 : vector<16x32xf32>
    %52 = math.exp %51 : vector<16x32xf32>
    %cst_20 = arith.constant dense<0.000000e+00> : vector<16xf32>
    %53 = vector.multi_reduction <add>, %52, %cst_20 [1] : vector<16x32xf32> to vector<16xf32>
    %54 = vector.shape_cast %53 : vector<16xf32> to vector<16x1xf32>
    %55 = tpu.reciprocal %54 : vector<16x1xf32> -> vector<16x1xf32>
    %56 = vector.broadcast %55 : vector<16x1xf32> to vector<16x32xf32>
    %57 = arith.mulf %52, %56 : vector<16x32xf32>
    %c3_i32 = arith.constant 3 : i32
    %cst_21 = arith.constant dense<0.000000e+00> : vector<16x32xf32>
    %58 = tpu.matmul %7, %57, %cst_21 {dimension_numbers = #tpu.dot_dimension_numbers<[1], [0], [0], [1], [0, 0, 1, 1], [], []>} : vector<16x16xf32>, vector<16x32xf32>, vector<16x32xf32> -> vector<16x32xf32>
    %cst_22 = arith.constant dense<0.000000e+00> : vector<16x32xf32>
    %59 = tpu.matmul %58, %8, %cst_22 {dimension_numbers = #tpu.dot_dimension_numbers<[1], [0], [0], [1], [0, 0, 1, 1], [], []>} : vector<16x32xf32>, vector<32x32xf32>, vector<16x32xf32> -> vector<16x32xf32>
    %60 = arith.subf %6, %59 : vector<16x32xf32>
    %cst_23 = arith.constant dense<0xFF800000> : vector<16xf32>
    %61 = vector.multi_reduction <maximumf>, %60, %cst_23 [1] : vector<16x32xf32> to vector<16xf32>
    %62 = vector.shape_cast %61 : vector<16xf32> to vector<16x1xf32>
    %63 = vector.broadcast %62 : vector<16x1xf32> to vector<16x32xf32>
    %64 = arith.subf %60, %63 : vector<16x32xf32>
    %65 = math.exp %64 : vector<16x32xf32>
    %cst_24 = arith.constant dense<0.000000e+00> : vector<16xf32>
    %66 = vector.multi_reduction <add>, %65, %cst_24 [1] : vector<16x32xf32> to vector<16xf32>
    %67 = vector.shape_cast %66 : vector<16xf32> to vector<16x1xf32>
    %68 = tpu.reciprocal %67 : vector<16x1xf32> -> vector<16x1xf32>
    %69 = vector.broadcast %68 : vector<16x1xf32> to vector<16x32xf32>
    %70 = arith.mulf %65, %69 : vector<16x32xf32>
    %c4_i32 = arith.constant 4 : i32
    %cst_25 = arith.constant dense<0.000000e+00> : vector<16x32xf32>
    %71 = tpu.matmul %7, %70, %cst_25 {dimension_numbers = #tpu.dot_dimension_numbers<[1], [0], [0], [1], [0, 0, 1, 1], [], []>} : vector<16x16xf32>, vector<16x32xf32>, vector<16x32xf32> -> vector<16x32xf32>
    %cst_26 = arith.constant dense<0.000000e+00> : vector<16x32xf32>
    %72 = tpu.matmul %71, %8, %cst_26 {dimension_numbers = #tpu.dot_dimension_numbers<[1], [0], [0], [1], [0, 0, 1, 1], [], []>} : vector<16x32xf32>, vector<32x32xf32>, vector<16x32xf32> -> vector<16x32xf32>
    %73 = arith.subf %6, %72 : vector<16x32xf32>
    %cst_27 = arith.constant dense<0xFF800000> : vector<16xf32>
    %74 = vector.multi_reduction <maximumf>, %73, %cst_27 [1] : vector<16x32xf32> to vector<16xf32>
    %75 = vector.shape_cast %74 : vector<16xf32> to vector<16x1xf32>
    %76 = vector.broadcast %75 : vector<16x1xf32> to vector<16x32xf32>
    %77 = arith.subf %73, %76 : vector<16x32xf32>
    %78 = math.exp %77 : vector<16x32xf32>
    %cst_28 = arith.constant dense<0.000000e+00> : vector<16xf32>
    %79 = vector.multi_reduction <add>, %78, %cst_28 [1] : vector<16x32xf32> to vector<16xf32>
    %80 = vector.shape_cast %79 : vector<16xf32> to vector<16x1xf32>
    %81 = tpu.reciprocal %80 : vector<16x1xf32> -> vector<16x1xf32>
    %82 = vector.broadcast %81 : vector<16x1xf32> to vector<16x32xf32>
    %83 = arith.mulf %78, %82 : vector<16x32xf32>
    %c0_29 = arith.constant 0 : index
    %c0_30 = arith.constant 0 : index
    %c0_31 = arith.constant 0 : index
    %84 = vector.load %arg4[%c0_29, %c0_30, %c0_31] : memref<1x16x32xf32, #tpu.memory_space<vmem>>, vector<1x16x32xf32>
    %85 = vector.shape_cast %84 : vector<1x16x32xf32> to vector<16x32xf32>
    %86 = vector.shape_cast %83 : vector<16x32xf32> to vector<1x16x32xf32>
    tpu.vector_store %arg4[%c0_29, %c0_30, %c0_31], %86 {strides = array<i32>} : memref<1x16x32xf32, #tpu.memory_space<vmem>>, vector<1x16x32xf32>,
    return
  }
  func.func @transform_0(%arg0: i32) -> (i32, i32, i32) {
    %c0_i32 = arith.constant 0 : i32
    %c0_i32_0 = arith.constant 0 : i32
    %c0_i32_1 = arith.constant 0 : i32
    return %arg0, %c0_i32, %c0_i32_0 : i32, i32, i32
  }
  func.func @transform_1(%arg0: i32) -> (i32, i32) {
    %c0_i32 = arith.constant 0 : i32
    %c0_i32_0 = arith.constant 0 : i32
    %c0_i32_1 = arith.constant 0 : i32
    return %c0_i32, %c0_i32_0 : i32, i32
  }
  func.func @transform_2(%arg0: i32) -> (i32, i32) {
    %c0_i32 = arith.constant 0 : i32
    %c0_i32_0 = arith.constant 0 : i32
    %c0_i32_1 = arith.constant 0 : i32
    return %c0_i32, %c0_i32_0 : i32, i32
  }
  func.func @transform_3(%arg0: i32) -> (i32, i32, i32) {
    %c0_i32 = arith.constant 0 : i32
    %c0_i32_0 = arith.constant 0 : i32
    %c0_i32_1 = arith.constant 0 : i32
    return %arg0, %c0_i32, %c0_i32_0 : i32, i32, i32
  }
}

</mosaic_0001>

<llo_original>
// kernel: tpu_custom_call.1
$region0: #{tpu_custom_call.1}
  #allocation0 [shape = 'u32[]', space=smem, size = 0x4, offset = 0x4, fixed_abs, tag = 'smem constant byte address 0x4 - core index']
  #allocation1 [shape = 'u32[144,128]{1,0:T(1,128)}', space=vmem, size = 0x12000, scoped, tag = 'internal scratch']
  %s0 = inlined_call_operand.hbm [shape: f32[2,16,32], index: 0, kind: input, shape index: {}]
  %s1 = inlined_call_operand.hbm [shape: f32[16,16], index: 1, kind: input, shape index: {}]
  %s2 = inlined_call_operand.hbm [shape: f32[32,32], index: 2, kind: input, shape index: {}]
  %s3 = inlined_call_operand.hbm [shape: f32[2,16,32], index: 3, kind: output, shape index: {}]
  %s4 = sld [smem:[#allocation0]]
  $region57: #{tpu_custom_call.1} parent=0
    _
  %s6 = ssub.s32 1, %s4
  %s7 = scalar_select 0, %s6, %s4
  $region1: #{tpu_custom_call.1} parent=0
    #allocation2 [shape = 'u8[16384]{0}', space=vmem, size = 0x4000, scoped, tag = 'input window, operand 0']
    #allocation3 [shape = 's32[2]{0}', space=sflag, size = 0x8, scoped, tag = 'scoped memory for tpu_custom_call.1']
    #allocation4 [shape = 's32[2]{0}', space=sflag, size = 0x8, scoped, tag = 'scoped memory for tpu_custom_call.1']
    #allocation5 [shape = 'u8[8192]{0}', space=vmem, size = 0x2000, scoped, tag = 'input window, operand 1, single buffered']
    #allocation6 [shape = 's32[1]{0}', space=sflag, size = 0x4, scoped, tag = 'scoped memory for tpu_custom_call.1']
    #allocation7 [shape = 'u8[16384]{0}', space=vmem, size = 0x4000, scoped, tag = 'input window, operand 2, single buffered']
    #allocation8 [shape = 'u8[16384]{0}', space=vmem, size = 0x4000, scoped, tag = 'output window, operand 0']
    %8 = vsyncpa [#allocation3], 0
    %s9 = scalar_lea.sflag [#allocation3], 1
    %10 = vsyncpa %s9, 0
    %11 = vsyncpa [#allocation6], 0
    %12 = vsyncpa [#allocation4], 0
    %s13 = scalar_lea.sflag [#allocation4], 1
    %14 = vsyncpa %s13, 0
    loop: start=0, step=1, limit=4
    $region2: #{tpu_custom_call.1} parent=1 // loop_pre_header
      _
    $region3: #{tpu_custom_call.1} parent=1 // loop_header
      %s16 = sphi 0, %s20
      %p17 = scmp.ge.s32.totalorder %s16, 4
      %s26 = sphi 0, %s28
      %s29 = sphi 0, %s26
      %s30 = sphi 0, %s29
      %s46 = sphi 0, %s30
      %s50 = sphi 0, %s50
      %s52 = sphi 0, %s50
      %s53 = sphi 0, %s52
      %s67 = sphi 0, %s53
      %s71 = sphi 0, %s71
      %s73 = sphi 0, %s71
      %s74 = sphi 0, %s73
      %s88 = sphi 0, %s74
      %s94 = sphi 0, %s96
      %s97 = sphi 0, %s94
      %s98 = sphi 0, %s97
      %s114 = sphi 0, %s98
    $region4: #{tpu_custom_call.1} parent=1 // loop_header_branch
      %19 = sbr.rel (%p17) target = $region8
    $region5: #{tpu_custom_call.1} parent=1 // loop_body
      %s21 = ssub.s32 %s16, 1
      %s22 = ssub.s32 %s16, 2
      %s23 = sadd.s32 %s16, 1
      %s24 = ssub.s32 %s16, %s23
      %p25 = scmp.eq.s32.totalorder %s24, 0
      %s27 = sadd.s32 %s26, 1
      %s28 = scalar_select %p25, %s26, %s27
      %p31 = pneg %p25
      %p32 = scmp.eq.s32.totalorder %s16, 1
      %p33 = por %p31, %p32
      %p34 = scmp.ne.s32.totalorder %s26, %s29
      %p35 = scmp.eq.s32.totalorder %s16, 0
      %p36 = por %p34, %p35
      %p37 = scmp.ne.s32.totalorder %s26, %s29
      %p38 = scmp.eq.s32.totalorder %s21, 1
      %p39 = por %p37, %p38
      %p40 = scmp.ne.s32.totalorder %s29, %s30
      %p41 = scmp.eq.s32.totalorder %s21, 0
      %p42 = por %p40, %p41
      %p43 = scmp.ne.s32.totalorder %s29, %s30
      %p44 = scmp.eq.s32.totalorder %s22, 1
      %p45 = por %p43, %p44
      %p47 = scmp.ne.s32.totalorder %s30, %s46
      %p48 = scmp.eq.s32.totalorder %s22, 0
      %p49 = por %p47, %p48
      %s51 = sadd.s32 %s50, 1
      %p54 = scmp.eq.s32.totalorder %s16, 1
      %p55 = scmp.ne.s32.totalorder %s50, %s52
      %p56 = scmp.eq.s32.totalorder %s16, 0
      %p57 = por %p55, %p56
      %p58 = scmp.ne.s32.totalorder %s50, %s52
      %p59 = scmp.eq.s32.totalorder %s21, 1
      %p60 = por %p58, %p59
      %p61 = scmp.ne.s32.totalorder %s52, %s53
      %p62 = scmp.eq.s32.totalorder %s21, 0
      %p63 = por %p61, %p62
      %p64 = scmp.ne.s32.totalorder %s52, %s53
      %p65 = scmp.eq.s32.totalorder %s22, 1
      %p66 = por %p64, %p65
      %p68 = scmp.ne.s32.totalorder %s53, %s67
      %p69 = scmp.eq.s32.totalorder %s22, 0
      %p70 = por %p68, %p69
      %s72 = sadd.s32 %s71, 1
      %p75 = scmp.eq.s32.totalorder %s16, 1
      %p76 = scmp.ne.s32.totalorder %s71, %s73
      %p77 = scmp.eq.s32.totalorder %s16, 0
      %p78 = por %p76, %p77
      %p79 = scmp.ne.s32.totalorder %s71, %s73
      %p80 = scmp.eq.s32.totalorder %s21, 1
      %p81 = por %p79, %p80
      %p82 = scmp.ne.s32.totalorder %s73, %s74
      %p83 = scmp.eq.s32.totalorder %s21, 0
      %p84 = por %p82, %p83
      %p85 = scmp.ne.s32.totalorder %s73, %s74
      %p86 = scmp.eq.s32.totalorder %s22, 1
      %p87 = por %p85, %p86
      %p89 = scmp.ne.s32.totalorder %s74, %s88
      %p90 = scmp.eq.s32.totalorder %s22, 0
      %p91 = por %p89, %p90
      %s92 = ssub.s32 %s16, %s23
      %p93 = scmp.eq.s32.totalorder %s92, 0
      %s95 = sadd.s32 %s94, 1
      %s96 = scalar_select %p93, %s94, %s95
      %p99 = pneg %p93
      %p100 = scmp.eq.s32.totalorder %s16, 1
      %p101 = por %p99, %p100
      %p102 = scmp.ne.s32.totalorder %s94, %s97
      %p103 = scmp.eq.s32.totalorder %s16, 0
      %p104 = por %p102, %p103
      %p105 = scmp.ne.s32.totalorder %s94, %s97
      %p106 = scmp.eq.s32.totalorder %s21, 1
      %p107 = por %p105, %p106
      %p108 = scmp.ne.s32.totalorder %s97, %s98
      %p109 = scmp.eq.s32.totalorder %s21, 0
      %p110 = por %p108, %p109
      %p111 = scmp.ne.s32.totalorder %s97, %s98
      %p112 = scmp.eq.s32.totalorder %s22, 1
      %p113 = por %p111, %p112
      %p115 = scmp.ne.s32.totalorder %s98, %s114
      %p116 = scmp.eq.s32.totalorder %s22, 0
      %p117 = por %p115, %p116
      %p118 = scmp.le.s32.totalorder 1, %s16
      %p119 = scmp.lt.s32.totalorder %s16, 3
      %p120 = pnand %p118, %p119
      %p121 = pneg %p120
      // Predicated region
      $region9: #{tpu_custom_call.1} parent=5 // pred_check
        _
      $region10: #{tpu_custom_call.1} parent=5 // pred_check_branch
        %123 = sbr.rel (%p120) target = $region12
      $region11: #{tpu_custom_call.1} parent=5 // pred_region
        %s124 = ssub.s32 %s16, 1
        // Predicated region
        $region13: #{tpu_custom_call.1} parent=11 // pred_check
          %p125 = pneg %p63
        $region14: #{tpu_custom_call.1} parent=11 // pred_check_branch
          %127 = sbr.rel (%p125) target = $region16
        $region15: #{tpu_custom_call.1} parent=11 // pred_region
          %s129 = ssub.s32 256, 256
          %130 = vsyncadd [#allocation6], %s129
          %s131 = sshll.u32 [#allocation5], 4
          %s132 = int_to_ptr.vmem [resolvable:$true] %s131
          %137 = dma.hbm_to_vmem [thread:$0]  %s1, 256, %s132, [#allocation6], 128, 128, 8
        $region16: #{tpu_custom_call.1} parent=11 // pred_fallthru
          _
        // Predicated region
        $region17: #{tpu_custom_call.1} parent=11 // pred_check
          %p138 = pneg %p84
        $region18: #{tpu_custom_call.1} parent=11 // pred_check_branch
          %140 = sbr.rel (%p138) target = $region20
        $region19: #{tpu_custom_call.1} parent=11 // pred_region
          %s142 = ssub.s32 512, 512
          %143 = vsyncadd [#allocation6], %s142
          %s144 = sshll.u32 [#allocation7], 4
          %s145 = int_to_ptr.vmem [resolvable:$true] %s144
          %150 = dma.hbm_to_vmem [thread:$0]  %s2, 512, %s145, [#allocation6], 128, 128, 8
        $region20: #{tpu_custom_call.1} parent=11 // pred_fallthru
          _
      $region12: #{tpu_custom_call.1} parent=5 // pred_fallthru
        _
      %p151 = scmp.lt.s32.totalorder %s16, 2
      // Predicated region
      $region21: #{tpu_custom_call.1} parent=5 // pred_check
        %p152 = pneg %p151
      $region22: #{tpu_custom_call.1} parent=5 // pred_check_branch
        %154 = sbr.rel (%p152) target = $region24
      $region23: #{tpu_custom_call.1} parent=5 // pred_region
        // Predicated region
        $region25: #{tpu_custom_call.1} parent=23 // pred_check
          %p155 = pneg %p36
        $region26: #{tpu_custom_call.1} parent=23 // pred_check_branch
          %157 = sbr.rel (%p155) target = $region28
        $region27: #{tpu_custom_call.1} parent=23 // pred_region
          %s158 = sand.u32 %s26, 1
          %s159 = scalar_lea.sflag [#allocation3], %s158
          %s160 = sand.u32 %s26, 1
          %s161 = smul.addr %s160, 16
          %s162 = scalar_lea.vmem [#allocation2], %s161
          %s164 = ssub.s32 256, 256
          %165 = vsyncadd %s159, %s164
          %s166 = smul.addr %s16, 2
          %s167 = smul.addr %s166, 128
          %s168 = scalar_lea.hbm %s0, %s167
          %s169 = sshll.u32 %s162, 4
          %s170 = int_to_ptr.vmem [resolvable:$true] %s169
          %175 = dma.hbm_to_vmem [thread:$0]  %s168, 256, %s170, %s159, 128, 128, 8
        $region28: #{tpu_custom_call.1} parent=23 // pred_fallthru
          _
      $region24: #{tpu_custom_call.1} parent=5 // pred_fallthru
        _
      %p176 = scmp.le.s32.totalorder 1, %s16
      %p177 = scmp.lt.s32.totalorder %s16, 3
      %p178 = pnand %p176, %p177
      %p179 = pneg %p178
      // Predicated region
      $region29: #{tpu_custom_call.1} parent=5 // pred_check
        _
      $region30: #{tpu_custom_call.1} parent=5 // pred_check_branch
        %181 = sbr.rel (%p178) target = $region32
      $region31: #{tpu_custom_call.1} parent=5 // pred_region
        %s182 = ssub.s32 %s16, 1
        %s183 = sand.u32 %s29, 1
        %s184 = scalar_lea.sflag [#allocation3], %s183
        %s185 = sand.u32 %s29, 1
        %s186 = smul.addr %s185, 16
        %s187 = scalar_lea.vmem [#allocation2], %s186
        // Predicated region
        $region33: #{tpu_custom_call.1} parent=31 // pred_check
          %p188 = pneg %p42
        $region34: #{tpu_custom_call.1} parent=31 // pred_check_branch
          %190 = sbr.rel (%p188) target = $region36
        $region35: #{tpu_custom_call.1} parent=31 // pred_region
          %191 = dma.done %s184, 256
        $region36: #{tpu_custom_call.1} parent=31 // pred_fallthru
          _
        // Predicated region
        $region37: #{tpu_custom_call.1} parent=31 // pred_check
          %p192 = pneg %p63
        $region38: #{tpu_custom_call.1} parent=31 // pred_check_branch
          %194 = sbr.rel (%p192) target = $region40
        $region39: #{tpu_custom_call.1} parent=31 // pred_region
          %195 = dma.done [#allocation6], 256
        $region40: #{tpu_custom_call.1} parent=31 // pred_fallthru
          _
        // Predicated region
        $region41: #{tpu_custom_call.1} parent=31 // pred_check
          %p196 = pneg %p84
        $region42: #{tpu_custom_call.1} parent=31 // pred_check_branch
          %198 = sbr.rel (%p196) target = $region44
        $region43: #{tpu_custom_call.1} parent=31 // pred_region
          %199 = dma.done [#allocation6], 512
        $region44: #{tpu_custom_call.1} parent=31 // pred_fallthru
          _
        %s200 = sand.u32 %s29, 1
        %s201 = scalar_lea.sflag [#allocation3], %s200
        %s202 = sand.u32 %s29, 1
        %s203 = smul.addr %s202, 16
        %s204 = scalar_lea.vmem [#allocation2], %s203
        %p205 = pneg %p42
        %p206 = pneg %p39
        %p207 = pneg %p63
        %p208 = pneg %p60
        %p209 = pneg %p84
        %p210 = pneg %p81
        %p211 = pneg %p110
        %p212 = pneg %p107
        %s213 = sand.u32 %s97, 1
        %s214 = scalar_lea.sflag [#allocation4], %s213
        %s215 = sand.u32 %s97, 1
        %s216 = smul.addr %s215, 16
        %s217 = scalar_lea.vmem [#allocation8], %s216
        %v218 = vld [vmem:[%s187] sm:$0xff]
        %v219 = vld [vmem:[%s187 + $0x8] sm:$0xff]
        %v220 = vmax.f32 %v218, 1e-06
        %v221 = vmax.f32 %v219, 1e-06
        %v222 = vmin.f32 %v220, 1.0
        %v223 = vmin.f32 %v221, 1.0
        %v224 = vlog2.pop %v222
        %v225 = vmul.f32 %v224, 0.6931472
        %v226 = vlog2.pop %v223
        %v227 = vmul.f32 %v226, 0.6931472
        %v228 = vld [vmem:[#allocation5] sm:$0xff]
        %v229 = vld [vmem:[#allocation5 + $0x8] sm:$0xff]
        %v230 = vld [vmem:[#allocation7] sm:$0xff]
        %v231 = vld [vmem:[#allocation7 + $0x8] sm:$0xff]
        %v232 = vld [vmem:[#allocation7 + $0x10] sm:$0xff]
        %v233 = vld [vmem:[#allocation7 + $0x18] sm:$0xff]
        %vm234 = vcmask 261120
        %v235 = vsel %vm234, %v225, -inf
        %236 = vmax.xlane.f32.xlu0 %v235
        %v237 = vpop.xlane.xlu0 %236
        %v238 = vsel %vm234, %v227, -inf
        %239 = vmax.xlane.f32.xlu0 %v238
        %v240 = vpop.xlane.xlu0 %239
        %v241 = vsub.f32 %v225, %v237
        %v242 = vsub.f32 %v227, %v240
        %v243 = vmul.f32 %v241, 1.442695
        %v244 = vpow.pop %v243
        %v245 = vmul.f32 %v242, 1.442695
        %v246 = vpow.pop %v245
        %v247 = vsel %vm234, %v244, 0.0
        %248 = vadd.xlane.f32.xlu0 %v247
        %v249 = vpop.xlane.xlu0 %248
        %v250 = vsel %vm234, %v246, 0.0
        %251 = vadd.xlane.f32.xlu0 %v250
        %v252 = vpop.xlane.xlu0 %251
        %v253 = vrcp.pop %v249
        %v254 = vrcp.pop %v252
        %v255 = vmul.f32 %v244, %v253
        %v256 = vmul.f32 %v246, %v254
        %vm257 = vcmask 130048
        %v259 = vsel %vm257, %v228, 0
        %v262 = vsel %vm257, %v229, 0
        %264 = vmatprep.subr.mxu0 0.0
        %265 = vmatpush1.msra.mxu0 %v255
        %266 = vmatprep.subr.mxu0 0.0
        %267 = vmatpush1.msra.mxu0 %v256
        %268 = vmatprep.subr.mxu0 0.0
        %269 = vmatpush1.msra.mxu0 0.0
        %270 = vmatprep.subr.mxu0 0.0
        %271 = vmatpush1.msra.mxu0 0.0
        %272 = vmatprep.subr.mxu0 0.0
        %273 = vmatpush1.msra.mxu0 0.0
        %274 = vmatprep.subr.mxu0 0.0
        %275 = vmatpush1.msra.mxu0 0.0
        %276 = vmatprep.subr.mxu0 0.0
        %277 = vmatpush1.msra.mxu0 0.0
        %278 = vmatprep.subr.mxu0 0.0
        %279 = vmatpush1.msra.mxu0 0.0
        %280 = vmatprep.subr.mxu0 0.0
        %281 = vmatpush1.msra.mxu0 0.0
        %282 = vmatprep.subr.mxu0 0.0
        %283 = vmatpush1.msra.mxu0 0.0
        %284 = vmatprep.subr.mxu0 0.0
        %285 = vmatpush1.msra.mxu0 0.0
        %286 = vmatprep.subr.mxu0 0.0
        %287 = vmatpush1.msra.mxu0 0.0
        %288 = vmatprep.subr.mxu0 0.0
        %289 = vmatpush1.msra.mxu0 0.0
        %290 = vmatprep.subr.mxu0 0.0
        %291 = vmatpush1.msra.mxu0 0.0
        %292 = vmatprep.subr.mxu0 0.0
        %293 = vmatpush1.msra.mxu0 0.0
        %294 = vmatprep.subr.mxu0 0.0
        %295 = vmatpush1.msra.mxu0 0.0
        %296 = vmatprep.subr.mxu0 0.0
        %297 = vmatpush1.msra.mxu0 0.0
        %298 = vmatprep.subr.mxu0 0.0
        %299 = vmatpush1.msra.mxu0 0.0
        %300 = vmatprep.subr.mxu0 0.0
        %301 = vmatpush1.msra.mxu0 0.0
        %302 = vmatprep.subr.mxu0 0.0
        %303 = vmatpush1.msra.mxu0 0.0
        %304 = vmatprep.subr.mxu0 0.0
        %305 = vmatpush1.msra.mxu0 0.0
        %306 = vmatprep.subr.mxu0 0.0
        %307 = vmatpush1.msra.mxu0 0.0
        %308 = vmatprep.subr.mxu0 0.0
        %309 = vmatpush1.msra.mxu0 0.0
        %310 = vmatprep.subr.mxu0 0.0
        %311 = vmatpush1.msra.mxu0 0.0
        %312 = vmatprep.subr.mxu0 0.0
        %313 = vmatpush1.msra.mxu0 0.0
        %314 = vmatprep.subr.mxu0 0.0
        %315 = vmatpush1.msra.mxu0 0.0
        %316 = vmatprep.subr.mxu0 0.0
        %317 = vmatpush1.msra.mxu0 0.0
        %318 = vmatprep.subr.mxu0 0.0
        %319 = vmatpush1.msra.mxu0 0.0
        %320 = vmatprep.subr.mxu0 0.0
        %321 = vmatpush1.msra.mxu0 0.0
        %322 = vmatprep.subr.mxu0 0.0
        %323 = vmatpush1.msra.mxu0 0.0
        %324 = vmatprep.subr.mxu0 0.0
        %325 = vmatpush1.msra.mxu0 0.0
        %326 = vmatprep.subr.mxu0 0.0
        %327 = vmatpush1.msra.mxu0 0.0
        %328 = vmatprep.mubr.f32.mxu0 0.0
        %329 = vmatmul.mubr.f32.gmra.mrb[0].mxu0 %v259
        %v330 = vpop.f32.mrb[0].mxu0
        %v331 = vadd.f32 0.0, %v330
        %v332 = vpop.f32.mrb[0].mxu0
        %333 = vmatprep.mubr.f32.mxu0 0.0
        %334 = vmatmul.mubr.f32.gmra.mrb[0].mxu0 %v262
        %v335 = vpop.f32.mrb[0].mxu0
        %v336 = vadd.f32 0.0, %v335
        %v337 = vpop.f32.mrb[0].mxu0
        %338 = vdwg.mxu0
        %v340 = vsel %vm234, %v331, 0
        %v343 = vsel %vm234, %v336, 0
        %345 = vmatprep.subr.mxu0 0.0
        %346 = vmatpush1.msra.mxu0 %v230
        %347 = vmatprep.subr.mxu0 0.0
        %348 = vmatpush1.msra.mxu0 %v231
        %349 = vmatprep.subr.mxu0 0.0
        %350 = vmatpush1.msra.mxu0 %v232
        %351 = vmatprep.subr.mxu0 0.0
        %352 = vmatpush1.msra.mxu0 %v233
        %353 = vmatprep.subr.mxu0 0.0
        %354 = vmatpush1.msra.mxu0 0.0
        %355 = vmatprep.subr.mxu0 0.0
        %356 = vmatpush1.msra.mxu0 0.0
        %357 = vmatprep.subr.mxu0 0.0
        %358 = vmatpush1.msra.mxu0 0.0
        %359 = vmatprep.subr.mxu0 0.0
        %360 = vmatpush1.msra.mxu0 0.0
        %361 = vmatprep.subr.mxu0 0.0
        %362 = vmatpush1.msra.mxu0 0.0
        %363 = vmatprep.subr.mxu0 0.0
        %364 = vmatpush1.msra.mxu0 0.0
        %365 = vmatprep.subr.mxu0 0.0
        %366 = vmatpush1.msra.mxu0 0.0
        %367 = vmatprep.subr.mxu0 0.0
        %368 = vmatpush1.msra.mxu0 0.0
        %369 = vmatprep.subr.mxu0 0.0
        %370 = vmatpush1.msra.mxu0 0.0
        %371 = vmatprep.subr.mxu0 0.0
        %372 = vmatpush1.msra.mxu0 0.0
        %373 = vmatprep.subr.mxu0 0.0
        %374 = vmatpush1.msra.mxu0 0.0
        %375 = vmatprep.subr.mxu0 0.0
        %376 = vmatpush1.msra.mxu0 0.0
        %377 = vmatprep.subr.mxu0 0.0
        %378 = vmatpush1.msra.mxu0 0.0
        %379 = vmatprep.subr.mxu0 0.0
        %380 = vmatpush1.msra.mxu0 0.0
        %381 = vmatprep.subr.mxu0 0.0
        %382 = vmatpush1.msra.mxu0 0.0
        %383 = vmatprep.subr.mxu0 0.0
        %384 = vmatpush1.msra.mxu0 0.0
        %385 = vmatprep.subr.mxu0 0.0
        %386 = vmatpush1.msra.mxu0 0.0
        %387 = vmatprep.subr.mxu0 0.0
        %388 = vmatpush1.msra.mxu0 0.0
        %389 = vmatprep.subr.mxu0 0.0
        %390 = vmatpush1.msra.mxu0 0.0
        %391 = vmatprep.subr.mxu0 0.0
        %392 = vmatpush1.msra.mxu0 0.0
        %393 = vmatprep.subr.mxu0 0.0
        %394 = vmatpush1.msra.mxu0 0.0
        %395 = vmatprep.subr.mxu0 0.0
        %396 = vmatpush1.msra.mxu0 0.0
        %397 = vmatprep.subr.mxu0 0.0
        %398 = vmatpush1.msra.mxu0 0.0
        %399 = vmatprep.subr.mxu0 0.0
        %400 = vmatpush1.msra.mxu0 0.0
        %401 = vmatprep.subr.mxu0 0.0
        %402 = vmatpush1.msra.mxu0 0.0
        %403 = vmatprep.subr.mxu0 0.0
        %404 = vmatpush1.msra.mxu0 0.0
        %405 = vmatprep.subr.mxu0 0.0
        %406 = vmatpush1.msra.mxu0 0.0
        %407 = vmatprep.subr.mxu0 0.0
        %408 = vmatpush1.msra.mxu0 0.0
        %409 = vmatprep.mubr.f32.mxu0 0.0
        %410 = vmatmul.mubr.f32.gmra.mrb[0].mxu0 %v340
        %v411 = vpop.f32.mrb[0].mxu0
        %v412 = vadd.f32 0.0, %v411
        %v413 = vpop.f32.mrb[0].mxu0
        %414 = vmatprep.mubr.f32.mxu0 0.0
        %415 = vmatmul.mubr.f32.gmra.mrb[0].mxu0 %v343
        %v416 = vpop.f32.mrb[0].mxu0
        %v417 = vadd.f32 0.0, %v416
        %v418 = vpop.f32.mrb[0].mxu0
        %419 = vdwg.mxu0
        %v420 = vsub.f32 %v225, %v412
        %v421 = vsub.f32 %v227, %v417
        %v422 = vsel %vm234, %v420, -inf
        %423 = vmax.xlane.f32.xlu0 %v422
        %v424 = vpop.xlane.xlu0 %423
        %v425 = vsel %vm234, %v421, -inf
        %426 = vmax.xlane.f32.xlu0 %v425
        %v427 = vpop.xlane.xlu0 %426
        %v428 = vsub.f32 %v420, %v424
        %v429 = vsub.f32 %v421, %v427
        %v430 = vmul.f32 %v428, 1.442695
        %v431 = vpow.pop %v430
        %v432 = vmul.f32 %v429, 1.442695
        %v433 = vpow.pop %v432
        %v434 = vsel %vm234, %v431, 0.0
        %435 = vadd.xlane.f32.xlu0 %v434
        %v436 = vpop.xlane.xlu0 %435
        %v437 = vsel %vm234, %v433, 0.0
        %438 = vadd.xlane.f32.xlu0 %v437
        %v439 = vpop.xlane.xlu0 %438
        %v440 = vrcp.pop %v436
        %v441 = vrcp.pop %v439
        %v442 = vmul.f32 %v431, %v440
        %v443 = vmul.f32 %v433, %v441
        %444 = vmatprep.subr.mxu0 0.0
        %445 = vmatpush1.msra.mxu0 %v442
        %446 = vmatprep.subr.mxu0 0.0
        %447 = vmatpush1.msra.mxu0 %v443
        %448 = vmatprep.subr.mxu0 0.0
        %449 = vmatpush1.msra.mxu0 0.0
        %450 = vmatprep.subr.mxu0 0.0
        %451 = vmatpush1.msra.mxu0 0.0
        %452 = vmatprep.subr.mxu0 0.0
        %453 = vmatpush1.msra.mxu0 0.0
        %454 = vmatprep.subr.mxu0 0.0
        %455 = vmatpush1.msra.mxu0 0.0
        %456 = vmatprep.subr.mxu0 0.0
        %457 = vmatpush1.msra.mxu0 0.0
        %458 = vmatprep.subr.mxu0 0.0
        %459 = vmatpush1.msra.mxu0 0.0
        %460 = vmatprep.subr.mxu0 0.0
        %461 = vmatpush1.msra.mxu0 0.0
        %462 = vmatprep.subr.mxu0 0.0
        %463 = vmatpush1.msra.mxu0 0.0
        %464 = vmatprep.subr.mxu0 0.0
        %465 = vmatpush1.msra.mxu0 0.0
        %466 = vmatprep.subr.mxu0 0.0
        %467 = vmatpush1.msra.mxu0 0.0
        %468 = vmatprep.subr.mxu0 0.0
        %469 = vmatpush1.msra.mxu0 0.0
        %470 = vmatprep.subr.mxu0 0.0
        %471 = vmatpush1.msra.mxu0 0.0
        %472 = vmatprep.subr.mxu0 0.0
        %473 = vmatpush1.msra.mxu0 0.0
        %474 = vmatprep.subr.mxu0 0.0
        %475 = vmatpush1.msra.mxu0 0.0
        %476 = vmatprep.subr.mxu0 0.0
        %477 = vmatpush1.msra.mxu0 0.0
        %478 = vmatprep.subr.mxu0 0.0
        %479 = vmatpush1.msra.mxu0 0.0
        %480 = vmatprep.subr.mxu0 0.0
        %481 = vmatpush1.msra.mxu0 0.0
        %482 = vmatprep.subr.mxu0 0.0
        %483 = vmatpush1.msra.mxu0 0.0
        %484 = vmatprep.subr.mxu0 0.0
        %485 = vmatpush1.msra.mxu0 0.0
        %486 = vmatprep.subr.mxu0 0.0
        %487 = vmatpush1.msra.mxu0 0.0
        %488 = vmatprep.subr.mxu0 0.0
        %489 = vmatpush1.msra.mxu0 0.0
        %490 = vmatprep.subr.mxu0 0.0
        %491 = vmatpush1.msra.mxu0 0.0
        %492 = vmatprep.subr.mxu0 0.0
        %493 = vmatpush1.msra.mxu0 0.0
        %494 = vmatprep.subr.mxu0 0.0
        %495 = vmatpush1.msra.mxu0 0.0
        %496 = vmatprep.subr.mxu0 0.0
        %497 = vmatpush1.msra.mxu0 0.0
        %498 = vmatprep.subr.mxu0 0.0
        %499 = vmatpush1.msra.mxu0 0.0
        %500 = vmatprep.subr.mxu0 0.0
        %501 = vmatpush1.msra.mxu0 0.0
        %502 = vmatprep.subr.mxu0 0.0
        %503 = vmatpush1.msra.mxu0 0.0
        %504 = vmatprep.subr.mxu0 0.0
        %505 = vmatpush1.msra.mxu0 0.0
        %506 = vmatprep.subr.mxu0 0.0
        %507 = vmatpush1.msra.mxu0 0.0
        %508 = vmatprep.mubr.f32.mxu0 0.0
        %509 = vmatmul.mubr.f32.gmra.mrb[0].mxu0 %v259
        %v510 = vpop.f32.mrb[0].mxu0
        %v511 = vadd.f32 0.0, %v510
        %v512 = vpop.f32.mrb[0].mxu0
        %513 = vmatprep.mubr.f32.mxu0 0.0
        %514 = vmatmul.mubr.f32.gmra.mrb[0].mxu0 %v262
        %v515 = vpop.f32.mrb[0].mxu0
        %v516 = vadd.f32 0.0, %v515
        %v517 = vpop.f32.mrb[0].mxu0
        %518 = vdwg.mxu0
        %v520 = vsel %vm234, %v511, 0
        %v523 = vsel %vm234, %v516, 0
        %525 = vmatprep.subr.mxu0 0.0
        %526 = vmatpush1.msra.mxu0 %v230
        %527 = vmatprep.subr.mxu0 0.0
        %528 = vmatpush1.msra.mxu0 %v231
        %529 = vmatprep.subr.mxu0 0.0
        %530 = vmatpush1.msra.mxu0 %v232
        %531 = vmatprep.subr.mxu0 0.0
        %532 = vmatpush1.msra.mxu0 %v233
        %533 = vmatprep.subr.mxu0 0.0
        %534 = vmatpush1.msra.mxu0 0.0
        %535 = vmatprep.subr.mxu0 0.0
        %536 = vmatpush1.msra.mxu0 0.0
        %537 = vmatprep.subr.mxu0 0.0
        %538 = vmatpush1.msra.mxu0 0.0
        %539 = vmatprep.subr.mxu0 0.0
        %540 = vmatpush1.msra.mxu0 0.0
        %541 = vmatprep.subr.mxu0 0.0
        %542 = vmatpush1.msra.mxu0 0.0
        %543 = vmatprep.subr.mxu0 0.0
        %544 = vmatpush1.msra.mxu0 0.0
        %545 = vmatprep.subr.mxu0 0.0
        %546 = vmatpush1.msra.mxu0 0.0
        %547 = vmatprep.subr.mxu0 0.0
        %548 = vmatpush1.msra.mxu0 0.0
        %549 = vmatprep.subr.mxu0 0.0
        %550 = vmatpush1.msra.mxu0 0.0
        %551 = vmatprep.subr.mxu0 0.0
        %552 = vmatpush1.msra.mxu0 0.0
        %553 = vmatprep.subr.mxu0 0.0
        %554 = vmatpush1.msra.mxu0 0.0
        %555 = vmatprep.subr.mxu0 0.0
        %556 = vmatpush1.msra.mxu0 0.0
        %557 = vmatprep.subr.mxu0 0.0
        %558 = vmatpush1.msra.mxu0 0.0
        %559 = vmatprep.subr.mxu0 0.0
        %560 = vmatpush1.msra.mxu0 0.0
        %561 = vmatprep.subr.mxu0 0.0
        %562 = vmatpush1.msra.mxu0 0.0
        %563 = vmatprep.subr.mxu0 0.0
        %564 = vmatpush1.msra.mxu0 0.0
        %565 = vmatprep.subr.mxu0 0.0
        %566 = vmatpush1.msra.mxu0 0.0
        %567 = vmatprep.subr.mxu0 0.0
        %568 = vmatpush1.msra.mxu0 0.0
        %569 = vmatprep.subr.mxu0 0.0
        %570 = vmatpush1.msra.mxu0 0.0
        %571 = vmatprep.subr.mxu0 0.0
        %572 = vmatpush1.msra.mxu0 0.0
        %573 = vmatprep.subr.mxu0 0.0
        %574 = vmatpush1.msra.mxu0 0.0
        %575 = vmatprep.subr.mxu0 0.0
        %576 = vmatpush1.msra.mxu0 0.0
        %577 = vmatprep.subr.mxu0 0.0
        %578 = vmatpush1.msra.mxu0 0.0
        %579 = vmatprep.subr.mxu0 0.0
        %580 = vmatpush1.msra.mxu0 0.0
        %581 = vmatprep.subr.mxu0 0.0
        %582 = vmatpush1.msra.mxu0 0.0
        %583 = vmatprep.subr.mxu0 0.0
        %584 = vmatpush1.msra.mxu0 0.0
        %585 = vmatprep.subr.mxu0 0.0
        %586 = vmatpush1.msra.mxu0 0.0
        %587 = vmatprep.subr.mxu0 0.0
        %588 = vmatpush1.msra.mxu0 0.0
        %589 = vmatprep.mubr.f32.mxu0 0.0
        %590 = vmatmul.mubr.f32.gmra.mrb[0].mxu0 %v520
        %v591 = vpop.f32.mrb[0].mxu0
        %v592 = vadd.f32 0.0, %v591
        %v593 = vpop.f32.mrb[0].mxu0
        %594 = vmatprep.mubr.f32.mxu0 0.0
        %595 = vmatmul.mubr.f32.gmra.mrb[0].mxu0 %v523
        %v596 = vpop.f32.mrb[0].mxu0
        %v597 = vadd.f32 0.0, %v596
        %v598 = vpop.f32.mrb[0].mxu0
        %599 = vdwg.mxu0
        %v600 = vsub.f32 %v225, %v592
        %v601 = vsub.f32 %v227, %v597
        %v602 = vsel %vm234, %v600, -inf
        %603 = vmax.xlane.f32.xlu0 %v602
        %v604 = vpop.xlane.xlu0 %603
        %v605 = vsel %vm234, %v601, -inf
        %606 = vmax.xlane.f32.xlu0 %v605
        %v607 = vpop.xlane.xlu0 %606
        %v608 = vsub.f32 %v600, %v604
        %v609 = vsub.f32 %v601, %v607
        %v610 = vmul.f32 %v608, 1.442695
        %v611 = vpow.pop %v610
        %v612 = vmul.f32 %v609, 1.442695
        %v613 = vpow.pop %v612
        %v614 = vsel %vm234, %v611, 0.0
        %615 = vadd.xlane.f32.xlu0 %v614
        %v616 = vpop.xlane.xlu0 %615
        %v617 = vsel %vm234, %v613, 0.0
        %618 = vadd.xlane.f32.xlu0 %v617
        %v619 = vpop.xlane.xlu0 %618
        %v620 = vrcp.pop %v616
        %v621 = vrcp.pop %v619
        %v622 = vmul.f32 %v611, %v620
        %v623 = vmul.f32 %v613, %v621
        %624 = vmatprep.subr.mxu0 0.0
        %625 = vmatpush1.msra.mxu0 %v622
        %626 = vmatprep.subr.mxu0 0.0
        %627 = vmatpush1.msra.mxu0 %v623
        %628 = vmatprep.subr.mxu0 0.0
        %629 = vmatpush1.msra.mxu0 0.0
        %630 = vmatprep.subr.mxu0 0.0
        %631 = vmatpush1.msra.mxu0 0.0
        %632 = vmatprep.subr.mxu0 0.0
        %633 = vmatpush1.msra.mxu0 0.0
        %634 = vmatprep.subr.mxu0 0.0
        %635 = vmatpush1.msra.mxu0 0.0
        %636 = vmatprep.subr.mxu0 0.0
        %637 = vmatpush1.msra.mxu0 0.0
        %638 = vmatprep.subr.mxu0 0.0
        %639 = vmatpush1.msra.mxu0 0.0
        %640 = vmatprep.subr.mxu0 0.0
        %641 = vmatpush1.msra.mxu0 0.0
        %642 = vmatprep.subr.mxu0 0.0
        %643 = vmatpush1.msra.mxu0 0.0
        %644 = vmatprep.subr.mxu0 0.0
        %645 = vmatpush1.msra.mxu0 0.0
        %646 = vmatprep.subr.mxu0 0.0
        %647 = vmatpush1.msra.mxu0 0.0
        %648 = vmatprep.subr.mxu0 0.0
        %649 = vmatpush1.msra.mxu0 0.0
        %650 = vmatprep.subr.mxu0 0.0
        %651 = vmatpush1.msra.mxu0 0.0
        %652 = vmatprep.subr.mxu0 0.0
        %653 = vmatpush1.msra.mxu0 0.0
        %654 = vmatprep.subr.mxu0 0.0
        %655 = vmatpush1.msra.mxu0 0.0
        %656 = vmatprep.subr.mxu0 0.0
        %657 = vmatpush1.msra.mxu0 0.0
        %658 = vmatprep.subr.mxu0 0.0
        %659 = vmatpush1.msra.mxu0 0.0
        %660 = vmatprep.subr.mxu0 0.0
        %661 = vmatpush1.msra.mxu0 0.0
        %662 = vmatprep.subr.mxu0 0.0
        %663 = vmatpush1.msra.mxu0 0.0
        %664 = vmatprep.subr.mxu0 0.0
        %665 = vmatpush1.msra.mxu0 0.0
        %666 = vmatprep.subr.mxu0 0.0
        %667 = vmatpush1.msra.mxu0 0.0
        %668 = vmatprep.subr.mxu0 0.0
        %669 = vmatpush1.msra.mxu0 0.0
        %670 = vmatprep.subr.mxu0 0.0
        %671 = vmatpush1.msra.mxu0 0.0
        %672 = vmatprep.subr.mxu0 0.0
        %673 = vmatpush1.msra.mxu0 0.0
        %674 = vmatprep.subr.mxu0 0.0
        %675 = vmatpush1.msra.mxu0 0.0
        %676 = vmatprep.subr.mxu0 0.0
        %677 = vmatpush1.msra.mxu0 0.0
        %678 = vmatprep.subr.mxu0 0.0
        %679 = vmatpush1.msra.mxu0 0.0
        %680 = vmatprep.subr.mxu0 0.0
        %681 = vmatpush1.msra.mxu0 0.0
        %682 = vmatprep.subr.mxu0 0.0
        %683 = vmatpush1.msra.mxu0 0.0
        %684 = vmatprep.subr.mxu0 0.0
        %685 = vmatpush1.msra.mxu0 0.0
        %686 = vmatprep.subr.mxu0 0.0
        %687 = vmatpush1.msra.mxu0 0.0
        %688 = vmatprep.mubr.f32.mxu0 0.0
        %689 = vmatmul.mubr.f32.gmra.mrb[0].mxu0 %v259
        %v690 = vpop.f32.mrb[0].mxu0
        %v691 = vadd.f32 0.0, %v690
        %v692 = vpop.f32.mrb[0].mxu0
        %693 = vmatprep.mubr.f32.mxu0 0.0
        %694 = vmatmul.mubr.f32.gmra.mrb[0].mxu0 %v262
        %v695 = vpop.f32.mrb[0].mxu0
        %v696 = vadd.f32 0.0, %v695
        %v697 = vpop.f32.mrb[0].mxu0
        %698 = vdwg.mxu0
        %v700 = vsel %vm234, %v691, 0
        %v703 = vsel %vm234, %v696, 0
        %705 = vmatprep.subr.mxu0 0.0
        %706 = vmatpush1.msra.mxu0 %v230
        %707 = vmatprep.subr.mxu0 0.0
        %708 = vmatpush1.msra.mxu0 %v231
        %709 = vmatprep.subr.mxu0 0.0
        %710 = vmatpush1.msra.mxu0 %v232
        %711 = vmatprep.subr.mxu0 0.0
        %712 = vmatpush1.msra.mxu0 %v233
        %713 = vmatprep.subr.mxu0 0.0
        %714 = vmatpush1.msra.mxu0 0.0
        %715 = vmatprep.subr.mxu0 0.0
        %716 = vmatpush1.msra.mxu0 0.0
        %717 = vmatprep.subr.mxu0 0.0
        %718 = vmatpush1.msra.mxu0 0.0
        %719 = vmatprep.subr.mxu0 0.0
        %720 = vmatpush1.msra.mxu0 0.0
        %721 = vmatprep.subr.mxu0 0.0
        %722 = vmatpush1.msra.mxu0 0.0
        %723 = vmatprep.subr.mxu0 0.0
        %724 = vmatpush1.msra.mxu0 0.0
        %725 = vmatprep.subr.mxu0 0.0
        %726 = vmatpush1.msra.mxu0 0.0
        %727 = vmatprep.subr.mxu0 0.0
        %728 = vmatpush1.msra.mxu0 0.0
        %729 = vmatprep.subr.mxu0 0.0
        %730 = vmatpush1.msra.mxu0 0.0
        %731 = vmatprep.subr.mxu0 0.0
        %732 = vmatpush1.msra.mxu0 0.0
        %733 = vmatprep.subr.mxu0 0.0
        %734 = vmatpush1.msra.mxu0 0.0
        %735 = vmatprep.subr.mxu0 0.0
        %736 = vmatpush1.msra.mxu0 0.0
        %737 = vmatprep.subr.mxu0 0.0
        %738 = vmatpush1.msra.mxu0 0.0
        %739 = vmatprep.subr.mxu0 0.0
        %740 = vmatpush1.msra.mxu0 0.0
        %741 = vmatprep.subr.mxu0 0.0
        %742 = vmatpush1.msra.mxu0 0.0
        %743 = vmatprep.subr.mxu0 0.0
        %744 = vmatpush1.msra.mxu0 0.0
        %745 = vmatprep.subr.mxu0 0.0
        %746 = vmatpush1.msra.mxu0 0.0
        %747 = vmatprep.subr.mxu0 0.0
        %748 = vmatpush1.msra.mxu0 0.0
        %749 = vmatprep.subr.mxu0 0.0
        %750 = vmatpush1.msra.mxu0 0.0
        %751 = vmatprep.subr.mxu0 0.0
        %752 = vmatpush1.msra.mxu0 0.0
        %753 = vmatprep.subr.mxu0 0.0
        %754 = vmatpush1.msra.mxu0 0.0
        %755 = vmatprep.subr.mxu0 0.0
        %756 = vmatpush1.msra.mxu0 0.0
        %757 = vmatprep.subr.mxu0 0.0
        %758 = vmatpush1.msra.mxu0 0.0
        %759 = vmatprep.subr.mxu0 0.0
        %760 = vmatpush1.msra.mxu0 0.0
        %761 = vmatprep.subr.mxu0 0.0
        %762 = vmatpush1.msra.mxu0 0.0
        %763 = vmatprep.subr.mxu0 0.0
        %764 = vmatpush1.msra.mxu0 0.0
        %765 = vmatprep.subr.mxu0 0.0
        %766 = vmatpush1.msra.mxu0 0.0
        %767 = vmatprep.subr.mxu0 0.0
        %768 = vmatpush1.msra.mxu0 0.0
        %769 = vmatprep.mubr.f32.mxu0 0.0
        %770 = vmatmul.mubr.f32.gmra.mrb[0].mxu0 %v700
        %v771 = vpop.f32.mrb[0].mxu0
        %v772 = vadd.f32 0.0, %v771
        %v773 = vpop.f32.mrb[0].mxu0
        %774 = vmatprep.mubr.f32.mxu0 0.0
        %775 = vmatmul.mubr.f32.gmra.mrb[0].mxu0 %v703
        %v776 = vpop.f32.mrb[0].mxu0
        %v777 = vadd.f32 0.0, %v776
        %v778 = vpop.f32.mrb[0].mxu0
        %779 = vdwg.mxu0
        %v780 = vsub.f32 %v225, %v772
        %v781 = vsub.f32 %v227, %v777
        %v782 = vsel %vm234, %v780, -inf
        %783 = vmax.xlane.f32.xlu0 %v782
        %v784 = vpop.xlane.xlu0 %783
        %v785 = vsel %vm234, %v781, -inf
        %786 = vmax.xlane.f32.xlu0 %v785
        %v787 = vpop.xlane.xlu0 %786
        %v788 = vsub.f32 %v780, %v784
        %v789 = vsub.f32 %v781, %v787
        %v790 = vmul.f32 %v788, 1.442695
        %v791 = vpow.pop %v790
        %v792 = vmul.f32 %v789, 1.442695
        %v793 = vpow.pop %v792
        %v794 = vsel %vm234, %v791, 0.0
        %795 = vadd.xlane.f32.xlu0 %v794
        %v796 = vpop.xlane.xlu0 %795
        %v797 = vsel %vm234, %v793, 0.0
        %798 = vadd.xlane.f32.xlu0 %v797
        %v799 = vpop.xlane.xlu0 %798
        %v800 = vrcp.pop %v796
        %v801 = vrcp.pop %v799
        %v802 = vmul.f32 %v791, %v800
        %v803 = vmul.f32 %v793, %v801
        %804 = vmatprep.subr.mxu0 0.0
        %805 = vmatpush1.msra.mxu0 %v802
        %806 = vmatprep.subr.mxu0 0.0
        %807 = vmatpush1.msra.mxu0 %v803
        %808 = vmatprep.subr.mxu0 0.0
        %809 = vmatpush1.msra.mxu0 0.0
        %810 = vmatprep.subr.mxu0 0.0
        %811 = vmatpush1.msra.mxu0 0.0
        %812 = vmatprep.subr.mxu0 0.0
        %813 = vmatpush1.msra.mxu0 0.0
        %814 = vmatprep.subr.mxu0 0.0
        %815 = vmatpush1.msra.mxu0 0.0
        %816 = vmatprep.subr.mxu0 0.0
        %817 = vmatpush1.msra.mxu0 0.0
        %818 = vmatprep.subr.mxu0 0.0
        %819 = vmatpush1.msra.mxu0 0.0
        %820 = vmatprep.subr.mxu0 0.0
        %821 = vmatpush1.msra.mxu0 0.0
        %822 = vmatprep.subr.mxu0 0.0
        %823 = vmatpush1.msra.mxu0 0.0
        %824 = vmatprep.subr.mxu0 0.0
        %825 = vmatpush1.msra.mxu0 0.0
        %826 = vmatprep.subr.mxu0 0.0
        %827 = vmatpush1.msra.mxu0 0.0
        %828 = vmatprep.subr.mxu0 0.0
        %829 = vmatpush1.msra.mxu0 0.0
        %830 = vmatprep.subr.mxu0 0.0
        %831 = vmatpush1.msra.mxu0 0.0
        %832 = vmatprep.subr.mxu0 0.0
        %833 = vmatpush1.msra.mxu0 0.0
        %834 = vmatprep.subr.mxu0 0.0
        %835 = vmatpush1.msra.mxu0 0.0
        %836 = vmatprep.subr.mxu0 0.0
        %837 = vmatpush1.msra.mxu0 0.0
        %838 = vmatprep.subr.mxu0 0.0
        %839 = vmatpush1.msra.mxu0 0.0
        %840 = vmatprep.subr.mxu0 0.0
        %841 = vmatpush1.msra.mxu0 0.0
        %842 = vmatprep.subr.mxu0 0.0
        %843 = vmatpush1.msra.mxu0 0.0
        %844 = vmatprep.subr.mxu0 0.0
        %845 = vmatpush1.msra.mxu0 0.0
        %846 = vmatprep.subr.mxu0 0.0
        %847 = vmatpush1.msra.mxu0 0.0
        %848 = vmatprep.subr.mxu0 0.0
        %849 = vmatpush1.msra.mxu0 0.0
        %850 = vmatprep.subr.mxu0 0.0
        %851 = vmatpush1.msra.mxu0 0.0
        %852 = vmatprep.subr.mxu0 0.0
        %853 = vmatpush1.msra.mxu0 0.0
        %854 = vmatprep.subr.mxu0 0.0
        %855 = vmatpush1.msra.mxu0 0.0
        %856 = vmatprep.subr.mxu0 0.0
        %857 = vmatpush1.msra.mxu0 0.0
        %858 = vmatprep.subr.mxu0 0.0
        %859 = vmatpush1.msra.mxu0 0.0
        %860 = vmatprep.subr.mxu0 0.0
        %861 = vmatpush1.msra.mxu0 0.0
        %862 = vmatprep.subr.mxu0 0.0
        %863 = vmatpush1.msra.mxu0 0.0
        %864 = vmatprep.subr.mxu0 0.0
        %865 = vmatpush1.msra.mxu0 0.0
        %866 = vmatprep.subr.mxu0 0.0
        %867 = vmatpush1.msra.mxu0 0.0
        %868 = vmatprep.mubr.f32.mxu0 0.0
        %869 = vmatmul.mubr.f32.gmra.mrb[0].mxu0 %v259
        %v870 = vpop.f32.mrb[0].mxu0
        %v871 = vadd.f32 0.0, %v870
        %v872 = vpop.f32.mrb[0].mxu0
        %873 = vmatprep.mubr.f32.mxu0 0.0
        %874 = vmatmul.mubr.f32.gmra.mrb[0].mxu0 %v262
        %v875 = vpop.f32.mrb[0].mxu0
        %v876 = vadd.f32 0.0, %v875
        %v877 = vpop.f32.mrb[0].mxu0
        %878 = vdwg.mxu0
        %v880 = vsel %vm234, %v871, 0
        %v883 = vsel %vm234, %v876, 0
        %885 = vmatprep.subr.mxu0 0.0
        %886 = vmatpush1.msra.mxu0 %v230
        %887 = vmatprep.subr.mxu0 0.0
        %888 = vmatpush1.msra.mxu0 %v231
        %889 = vmatprep.subr.mxu0 0.0
        %890 = vmatpush1.msra.mxu0 %v232
        %891 = vmatprep.subr.mxu0 0.0
        %892 = vmatpush1.msra.mxu0 %v233
        %893 = vmatprep.subr.mxu0 0.0
        %894 = vmatpush1.msra.mxu0 0.0
        %895 = vmatprep.subr.mxu0 0.0
        %896 = vmatpush1.msra.mxu0 0.0
        %897 = vmatprep.subr.mxu0 0.0
        %898 = vmatpush1.msra.mxu0 0.0
        %899 = vmatprep.subr.mxu0 0.0
        %900 = vmatpush1.msra.mxu0 0.0
        %901 = vmatprep.subr.mxu0 0.0
        %902 = vmatpush1.msra.mxu0 0.0
        %903 = vmatprep.subr.mxu0 0.0
        %904 = vmatpush1.msra.mxu0 0.0
        %905 = vmatprep.subr.mxu0 0.0
        %906 = vmatpush1.msra.mxu0 0.0
        %907 = vmatprep.subr.mxu0 0.0
        %908 = vmatpush1.msra.mxu0 0.0
        %909 = vmatprep.subr.mxu0 0.0
        %910 = vmatpush1.msra.mxu0 0.0
        %911 = vmatprep.subr.mxu0 0.0
        %912 = vmatpush1.msra.mxu0 0.0
        %913 = vmatprep.subr.mxu0 0.0
        %914 = vmatpush1.msra.mxu0 0.0
        %915 = vmatprep.subr.mxu0 0.0
        %916 = vmatpush1.msra.mxu0 0.0
        %917 = vmatprep.subr.mxu0 0.0
        %918 = vmatpush1.msra.mxu0 0.0
        %919 = vmatprep.subr.mxu0 0.0
        %920 = vmatpush1.msra.mxu0 0.0
        %921 = vmatprep.subr.mxu0 0.0
        %922 = vmatpush1.msra.mxu0 0.0
        %923 = vmatprep.subr.mxu0 0.0
        %924 = vmatpush1.msra.mxu0 0.0
        %925 = vmatprep.subr.mxu0 0.0
        %926 = vmatpush1.msra.mxu0 0.0
        %927 = vmatprep.subr.mxu0 0.0
        %928 = vmatpush1.msra.mxu0 0.0
        %929 = vmatprep.subr.mxu0 0.0
        %930 = vmatpush1.msra.mxu0 0.0
        %931 = vmatprep.subr.mxu0 0.0
        %932 = vmatpush1.msra.mxu0 0.0
        %933 = vmatprep.subr.mxu0 0.0
        %934 = vmatpush1.msra.mxu0 0.0
        %935 = vmatprep.subr.mxu0 0.0
        %936 = vmatpush1.msra.mxu0 0.0
        %937 = vmatprep.subr.mxu0 0.0
        %938 = vmatpush1.msra.mxu0 0.0
        %939 = vmatprep.subr.mxu0 0.0
        %940 = vmatpush1.msra.mxu0 0.0
        %941 = vmatprep.subr.mxu0 0.0
        %942 = vmatpush1.msra.mxu0 0.0
        %943 = vmatprep.subr.mxu0 0.0
        %944 = vmatpush1.msra.mxu0 0.0
        %945 = vmatprep.subr.mxu0 0.0
        %946 = vmatpush1.msra.mxu0 0.0
        %947 = vmatprep.subr.mxu0 0.0
        %948 = vmatpush1.msra.mxu0 0.0
        %949 = vmatprep.mubr.f32.mxu0 0.0
        %950 = vmatmul.mubr.f32.gmra.mrb[0].mxu0 %v880
        %v951 = vpop.f32.mrb[0].mxu0
        %v952 = vadd.f32 0.0, %v951
        %v953 = vpop.f32.mrb[0].mxu0
        %954 = vmatprep.mubr.f32.mxu0 0.0
        %955 = vmatmul.mubr.f32.gmra.mrb[0].mxu0 %v883
        %v956 = vpop.f32.mrb[0].mxu0
        %v957 = vadd.f32 0.0, %v956
        %v958 = vpop.f32.mrb[0].mxu0
        %959 = vdwg.mxu0
        %v960 = vsub.f32 %v225, %v952
        %v961 = vsub.f32 %v227, %v957
        %v962 = vsel %vm234, %v960, -inf
        %963 = vmax.xlane.f32.xlu0 %v962
        %v964 = vpop.xlane.xlu0 %963
        %v965 = vsel %vm234, %v961, -inf
        %966 = vmax.xlane.f32.xlu0 %v965
        %v967 = vpop.xlane.xlu0 %966
        %v968 = vsub.f32 %v960, %v964
        %v969 = vsub.f32 %v961, %v967
        %v970 = vmul.f32 %v968, 1.442695
        %v971 = vpow.pop %v970
        %v972 = vmul.f32 %v969, 1.442695
        %v973 = vpow.pop %v972
        %v974 = vsel %vm234, %v971, 0.0
        %975 = vadd.xlane.f32.xlu0 %v974
        %v976 = vpop.xlane.xlu0 %975
        %v977 = vsel %vm234, %v973, 0.0
        %978 = vadd.xlane.f32.xlu0 %v977
        %v979 = vpop.xlane.xlu0 %978
        %v980 = vrcp.pop %v976
        %v981 = vrcp.pop %v979
        %v982 = vmul.f32 %v971, %v980
        %v983 = vmul.f32 %v973, %v981
        %984 = vmatprep.subr.mxu0 0.0
        %985 = vmatpush1.msra.mxu0 %v982
        %986 = vmatprep.subr.mxu0 0.0
        %987 = vmatpush1.msra.mxu0 %v983
        %988 = vmatprep.subr.mxu0 0.0
        %989 = vmatpush1.msra.mxu0 0.0
        %990 = vmatprep.subr.mxu0 0.0
        %991 = vmatpush1.msra.mxu0 0.0
        %992 = vmatprep.subr.mxu0 0.0
        %993 = vmatpush1.msra.mxu0 0.0
        %994 = vmatprep.subr.mxu0 0.0
        %995 = vmatpush1.msra.mxu0 0.0
        %996 = vmatprep.subr.mxu0 0.0
        %997 = vmatpush1.msra.mxu0 0.0
        %998 = vmatprep.subr.mxu0 0.0
        %999 = vmatpush1.msra.mxu0 0.0
        %1000 = vmatprep.subr.mxu0 0.0
        %1001 = vmatpush1.msra.mxu0 0.0
        %1002 = vmatprep.subr.mxu0 0.0
        %1003 = vmatpush1.msra.mxu0 0.0
        %1004 = vmatprep.subr.mxu0 0.0
        %1005 = vmatpush1.msra.mxu0 0.0
        %1006 = vmatprep.subr.mxu0 0.0
        %1007 = vmatpush1.msra.mxu0 0.0
        %1008 = vmatprep.subr.mxu0 0.0
        %1009 = vmatpush1.msra.mxu0 0.0
        %1010 = vmatprep.subr.mxu0 0.0
        %1011 = vmatpush1.msra.mxu0 0.0
        %1012 = vmatprep.subr.mxu0 0.0
        %1013 = vmatpush1.msra.mxu0 0.0
        %1014 = vmatprep.subr.mxu0 0.0
        %1015 = vmatpush1.msra.mxu0 0.0
        %1016 = vmatprep.subr.mxu0 0.0
        %1017 = vmatpush1.msra.mxu0 0.0
        %1018 = vmatprep.subr.mxu0 0.0
        %1019 = vmatpush1.msra.mxu0 0.0
        %1020 = vmatprep.subr.mxu0 0.0
        %1021 = vmatpush1.msra.mxu0 0.0
        %1022 = vmatprep.subr.mxu0 0.0
        %1023 = vmatpush1.msra.mxu0 0.0
        %1024 = vmatprep.subr.mxu0 0.0
        %1025 = vmatpush1.msra.mxu0 0.0
        %1026 = vmatprep.subr.mxu0 0.0
        %1027 = vmatpush1.msra.mxu0 0.0
        %1028 = vmatprep.subr.mxu0 0.0
        %1029 = vmatpush1.msra.mxu0 0.0
        %1030 = vmatprep.subr.mxu0 0.0
        %1031 = vmatpush1.msra.mxu0 0.0
        %1032 = vmatprep.subr.mxu0 0.0
        %1033 = vmatpush1.msra.mxu0 0.0
        %1034 = vmatprep.subr.mxu0 0.0
        %1035 = vmatpush1.msra.mxu0 0.0
        %1036 = vmatprep.subr.mxu0 0.0
        %1037 = vmatpush1.msra.mxu0 0.0
        %1038 = vmatprep.subr.mxu0 0.0
        %1039 = vmatpush1.msra.mxu0 0.0
        %1040 = vmatprep.subr.mxu0 0.0
        %1041 = vmatpush1.msra.mxu0 0.0
        %1042 = vmatprep.subr.mxu0 0.0
        %1043 = vmatpush1.msra.mxu0 0.0
        %1044 = vmatprep.subr.mxu0 0.0
        %1045 = vmatpush1.msra.mxu0 0.0
        %1046 = vmatprep.subr.mxu0 0.0
        %1047 = vmatpush1.msra.mxu0 0.0
        %1048 = vmatprep.mubr.f32.mxu0 0.0
        %1049 = vmatmul.mubr.f32.gmra.mrb[0].mxu0 %v259
        %v1050 = vpop.f32.mrb[0].mxu0
        %v1051 = vadd.f32 0.0, %v1050
        %v1052 = vpop.f32.mrb[0].mxu0
        %1053 = vmatprep.mubr.f32.mxu0 0.0
        %1054 = vmatmul.mubr.f32.gmra.mrb[0].mxu0 %v262
        %v1055 = vpop.f32.mrb[0].mxu0
        %v1056 = vadd.f32 0.0, %v1055
        %v1057 = vpop.f32.mrb[0].mxu0
        %1058 = vdwg.mxu0
        %v1060 = vsel %vm234, %v1051, 0
        %v1063 = vsel %vm234, %v1056, 0
        %1065 = vmatprep.subr.mxu0 0.0
        %1066 = vmatpush1.msra.mxu0 %v230
        %1067 = vmatprep.subr.mxu0 0.0
        %1068 = vmatpush1.msra.mxu0 %v231
        %1069 = vmatprep.subr.mxu0 0.0
        %1070 = vmatpush1.msra.mxu0 %v232
        %1071 = vmatprep.subr.mxu0 0.0
        %1072 = vmatpush1.msra.mxu0 %v233
        %1073 = vmatprep.subr.mxu0 0.0
        %1074 = vmatpush1.msra.mxu0 0.0
        %1075 = vmatprep.subr.mxu0 0.0
        %1076 = vmatpush1.msra.mxu0 0.0
        %1077 = vmatprep.subr.mxu0 0.0
        %1078 = vmatpush1.msra.mxu0 0.0
        %1079 = vmatprep.subr.mxu0 0.0
        %1080 = vmatpush1.msra.mxu0 0.0
        %1081 = vmatprep.subr.mxu0 0.0
        %1082 = vmatpush1.msra.mxu0 0.0
        %1083 = vmatprep.subr.mxu0 0.0
        %1084 = vmatpush1.msra.mxu0 0.0
        %1085 = vmatprep.subr.mxu0 0.0
        %1086 = vmatpush1.msra.mxu0 0.0
        %1087 = vmatprep.subr.mxu0 0.0
        %1088 = vmatpush1.msra.mxu0 0.0
        %1089 = vmatprep.subr.mxu0 0.0
        %1090 = vmatpush1.msra.mxu0 0.0
        %1091 = vmatprep.subr.mxu0 0.0
        %1092 = vmatpush1.msra.mxu0 0.0
        %1093 = vmatprep.subr.mxu0 0.0
        %1094 = vmatpush1.msra.mxu0 0.0
        %1095 = vmatprep.subr.mxu0 0.0
        %1096 = vmatpush1.msra.mxu0 0.0
        %1097 = vmatprep.subr.mxu0 0.0
        %1098 = vmatpush1.msra.mxu0 0.0
        %1099 = vmatprep.subr.mxu0 0.0
        %1100 = vmatpush1.msra.mxu0 0.0
        %1101 = vmatprep.subr.mxu0 0.0
        %1102 = vmatpush1.msra.mxu0 0.0
        %1103 = vmatprep.subr.mxu0 0.0
        %1104 = vmatpush1.msra.mxu0 0.0
        %1105 = vmatprep.subr.mxu0 0.0
        %1106 = vmatpush1.msra.mxu0 0.0
        %1107 = vmatprep.subr.mxu0 0.0
        %1108 = vmatpush1.msra.mxu0 0.0
        %1109 = vmatprep.subr.mxu0 0.0
        %1110 = vmatpush1.msra.mxu0 0.0
        %1111 = vmatprep.subr.mxu0 0.0
        %1112 = vmatpush1.msra.mxu0 0.0
        %1113 = vmatprep.subr.mxu0 0.0
        %1114 = vmatpush1.msra.mxu0 0.0
        %1115 = vmatprep.subr.mxu0 0.0
        %1116 = vmatpush1.msra.mxu0 0.0
        %1117 = vmatprep.subr.mxu0 0.0
        %1118 = vmatpush1.msra.mxu0 0.0
        %1119 = vmatprep.subr.mxu0 0.0
        %1120 = vmatpush1.msra.mxu0 0.0
        %1121 = vmatprep.subr.mxu0 0.0
        %1122 = vmatpush1.msra.mxu0 0.0
        %1123 = vmatprep.subr.mxu0 0.0
        %1124 = vmatpush1.msra.mxu0 0.0
        %1125 = vmatprep.subr.mxu0 0.0
        %1126 = vmatpush1.msra.mxu0 0.0
        %1127 = vmatprep.subr.mxu0 0.0
        %1128 = vmatpush1.msra.mxu0 0.0
        %1129 = vmatprep.mubr.f32.mxu0 0.0
        %1130 = vmatmul.mubr.f32.gmra.mrb[0].mxu0 %v1060
        %v1131 = vpop.f32.mrb[0].mxu0
        %v1132 = vadd.f32 0.0, %v1131
        %v1133 = vpop.f32.mrb[0].mxu0
        %1134 = vmatprep.mubr.f32.mxu0 0.0
        %1135 = vmatmul.mubr.f32.gmra.mrb[0].mxu0 %v1063
        %v1136 = vpop.f32.mrb[0].mxu0
        %v1137 = vadd.f32 0.0, %v1136
        %v1138 = vpop.f32.mrb[0].mxu0
        %1139 = vdwg.mxu0
        %v1140 = vsub.f32 %v225, %v1132
        %v1141 = vsub.f32 %v227, %v1137
        %v1142 = vsel %vm234, %v1140, -inf
        %1143 = vmax.xlane.f32.xlu0 %v1142
        %v1144 = vpop.xlane.xlu0 %1143
        %v1145 = vsel %vm234, %v1141, -inf
        %1146 = vmax.xlane.f32.xlu0 %v1145
        %v1147 = vpop.xlane.xlu0 %1146
        %v1148 = vsub.f32 %v1140, %v1144
        %v1149 = vsub.f32 %v1141, %v1147
        %v1150 = vmul.f32 %v1148, 1.442695
        %v1151 = vpow.pop %v1150
        %v1152 = vmul.f32 %v1149, 1.442695
        %v1153 = vpow.pop %v1152
        %v1154 = vsel %vm234, %v1151, 0.0
        %1155 = vadd.xlane.f32.xlu0 %v1154
        %v1156 = vpop.xlane.xlu0 %1155
        %v1157 = vsel %vm234, %v1153, 0.0
        %1158 = vadd.xlane.f32.xlu0 %v1157
        %v1159 = vpop.xlane.xlu0 %1158
        %v1160 = vrcp.pop %v1156
        %v1161 = vrcp.pop %v1159
        %v1162 = vmul.f32 %v1151, %v1160
        %v1163 = vmul.f32 %v1153, %v1161
        %1164 = vst.msk [vmem:[%s217] sm:$0xff] %vm234, %v1162
        %1165 = vst.msk [vmem:[%s217 + $0x8] sm:$0xff] %vm234, %v1163
        %s1166 = sand.u32 %s97, 1
        %s1167 = scalar_lea.sflag [#allocation4], %s1166
        %s1168 = sand.u32 %s97, 1
        %s1169 = smul.addr %s1168, 16
        %s1170 = scalar_lea.vmem [#allocation8], %s1169
        // Predicated region
        $region45: #{tpu_custom_call.1} parent=31 // pred_check
          %p1171 = pneg %p107
        $region46: #{tpu_custom_call.1} parent=31 // pred_check_branch
          %1173 = sbr.rel (%p1171) target = $region48
        $region47: #{tpu_custom_call.1} parent=31 // pred_region
          %s1175 = ssub.s32 256, 256
          %1176 = vsyncadd %s1167, %s1175
          %s1177 = smul.addr %s21, 2
          %s1178 = smul.addr %s1177, 128
          %s1179 = scalar_lea.hbm %s3, %s1178
          %s1180 = sshll.u32 %s1170, 4
          %s1181 = int_to_ptr.vmem [resolvable:$true] %s1180
          %1186 = dma.vmem_to_hbm [thread:$0]  %s1181, 256, %s1179, %s1167, 128, 128, 8
        $region48: #{tpu_custom_call.1} parent=31 // pred_fallthru
          _
      $region32: #{tpu_custom_call.1} parent=5 // pred_fallthru
        _
      %p1187 = scmp.le.s32.totalorder 2, %s16
      // Predicated region
      $region49: #{tpu_custom_call.1} parent=5 // pred_check
        %p1188 = pneg %p1187
      $region50: #{tpu_custom_call.1} parent=5 // pred_check_branch
        %1190 = sbr.rel (%p1188) target = $region52
      $region51: #{tpu_custom_call.1} parent=5 // pred_region
        %s1191 = ssub.s32 %s16, 2
        // Predicated region
        $region53: #{tpu_custom_call.1} parent=51 // pred_check
          %p1192 = pneg %p113
        $region54: #{tpu_custom_call.1} parent=51 // pred_check_branch
          %1194 = sbr.rel (%p1192) target = $region56
        $region55: #{tpu_custom_call.1} parent=51 // pred_region
          %s1195 = sand.u32 %s98, 1
          %s1196 = scalar_lea.sflag [#allocation4], %s1195
          %s1197 = sand.u32 %s98, 1
          %s1198 = smul.addr %s1197, 16
          %s1199 = scalar_lea.vmem [#allocation8], %s1198
          %1200 = dma.done %s1196, 256
        $region56: #{tpu_custom_call.1} parent=51 // pred_fallthru
          _
      $region52: #{tpu_custom_call.1} parent=5 // pred_fallthru
        _
    $region6: #{tpu_custom_call.1} parent=1 // loop_footer
      %s20 = sadd.s32 1, %s16
    $region7: #{tpu_custom_call.1} parent=1 // loop_footer_branch
      %15 = sbr.rel target = $region3
    $region8: #{tpu_custom_call.1} parent=1 // loop_exit
      _
    %1201 = vsyncpa [#allocation3], 1
    %s1202 = scalar_lea.sflag [#allocation3], 1
    %1203 = vsyncpa %s1202, 1
    %1204 = vsyncpa [#allocation6], 1
    %1205 = vsyncpa [#allocation4], 1
    %s1206 = scalar_lea.sflag [#allocation4], 1
    %1207 = vsyncpa %s1206, 1

</llo_original>
